<compile_context>
chip_gen: v7x
topology: tpu7x:2x2x1
jax: 0.10.0
libtpu: 0.0.40
codegen_flags: <defaults>
</compile_context>

<pallas_src>
import functools

import jax
import jax.numpy as jnp
from jax.experimental import pallas as pl
from jax.experimental.pallas import tpu as pltpu


def _mmd2_kernel(z_ref, out_ref, g_acc, *, Bx, By, mults, bandwidth):
    """z_ref:   VMEM (N, TK) tile of the stacked feature matrix Z.
    out_ref: SMEM (1, 1) f32 scalar result XX - 2*XY + YY.
    g_acc:   VMEM (N, N) f32 Gram accumulator (resident across the grid).
    """
    k = pl.program_id(0)

    @pl.when(k == 0)
    def _():
        g_acc[...] = jnp.zeros_like(g_acc)

    # Gram partial: contract the feature (last) axes of the tile with itself.
    # Input dtype is kept as-is (f32 or bf16); MXU accumulates into f32.
    z = z_ref[...]
    g_acc[...] += jax.lax.dot_general(
        z, z, dimension_numbers=(((1,), (1,)), ((), ())),
        preferred_element_type=jnp.float32)

    @pl.when(k == pl.num_programs(0) - 1)
    def _():
        G = g_acc[...]
        N = Bx + By

        # Squared norms are the diagonal of G: mask + row/col sums (done once).
        rows = jax.lax.broadcasted_iota(jnp.int32, (N, N), 0)
        cols = jax.lax.broadcasted_iota(jnp.int32, (N, N), 1)
        Gd = jnp.where(rows == cols, G, 0.0)
        sq_col = jnp.sum(Gd, axis=1, keepdims=True)   # (N, 1)  ||z_i||^2
        sq_row = jnp.sum(Gd, axis=0, keepdims=True)   # (1, N)  ||z_j||^2

        # ||z_i - z_j||^2 = ||z_i||^2 + ||z_j||^2 - 2 z_i.z_j  (clamped >= 0)
        L2 = jnp.maximum(sq_col + sq_row - 2.0 * G, 0.0)

        if bandwidth is None:
            bw = jnp.sum(L2) / jnp.float32(N * N - N)
        else:
            bw = jnp.float32(bandwidth)
        inv_bw = 1.0 / bw                              # single scalar reciprocal

        # Weight outer product fusing the XX/XY/YY block means:
        #   w_i = +1/Bx for X-rows, -1/By for Y-rows  =>
        #   sum_ij w_i w_j K_ij = XX - 2*XY + YY
        r_col = jax.lax.broadcasted_iota(jnp.int32, (N, 1), 0)
        r_row = jax.lax.broadcasted_iota(jnp.int32, (1, N), 1)
        w_col = jnp.where(r_col < Bx, jnp.float32(1.0 / Bx),
                          jnp.float32(-1.0 / By))
        w_row = jnp.where(r_row < Bx, jnp.float32(1.0 / Bx),
                          jnp.float32(-1.0 / By))
        W = w_col * w_row                              # (N, N)

        acc = jnp.zeros((), jnp.float32)
        for mult in mults:                             # static, small, unrolled
            scale = jnp.float32(-1.0 / mult) * inv_bw  # scalar; no N^2 divides
            acc = acc + jnp.sum(W * jnp.exp(L2 * scale))
        out_ref[0, 0] = acc


def mmd2(X, Y, n_kernels=5, mul_factor=2.0, bandwidth=None):
    """JAX/Pallas equivalent of MMD2(RBFKernel(...)).forward(X, Y) -> scalar."""
    Bx, By = X.shape[0], Y.shape[0]
    Xf = jnp.reshape(X, (Bx, -1))
    Yf = jnp.reshape(Y, (By, -1))
    Z = jnp.concatenate([Xf, Yf], axis=0)              # (N, D)
    if not jnp.issubdtype(Z.dtype, jnp.floating):
        Z = Z.astype(jnp.float32)                      # keep bf16/f32 as-is
    N, D = Z.shape
    itemsize = jnp.dtype(Z.dtype).itemsize

    # Feature tile: as large as possible while the double-buffered Z tiles
    # stay well inside the VMEM budget (target multi-MiB blocks; the loop is
    # HBM-bandwidth bound, so big tiles amortize per-grid-step overhead).
    in_buf_budget = 24 << 20                           # bytes for 2x (N, tk) buffers
    max_tk = max(128, ((in_buf_budget // (2 * N * itemsize)) // 128) * 128)
    tk = int(min(max_tk, 8192, pl.cdiv(D, 128) * 128))
    d_pad = pl.cdiv(D, tk) * tk
    if d_pad != D:
        # Zero padding does not change dot products or norms.
        Z = jnp.pad(Z, ((0, 0), (0, d_pad - D)))

    # Deterministic RBFKernel "parameters": bandwidth multipliers, baked in.
    mults = tuple(float(mul_factor) ** (i - n_kernels // 2)
                  for i in range(n_kernels))

    # VMEM request: double-buffered input + Gram accumulator + epilogue temps,
    # capped at 48 MiB so the same tiling also fits v7x's 64 MiB VMEM.
    vmem_need = 2 * N * tk * itemsize + 8 * N * N * 4 + (2 << 20)
    vmem_limit = int(min(max(vmem_need, 16 << 20), 48 << 20))

    kernel = functools.partial(_mmd2_kernel, Bx=Bx, By=By, mults=mults,
                               bandwidth=bandwidth)

    out = pl.pallas_call(
        kernel,
        out_shape=jax.ShapeDtypeStruct((1, 1), jnp.float32),
        grid_spec=pltpu.PrefetchScalarGridSpec(
            num_scalar_prefetch=0,
            grid=(d_pad // tk,),
            in_specs=[pl.BlockSpec((N, tk), lambda k: (0, k))],
            out_specs=pl.BlockSpec(memory_space=pltpu.MemorySpace.SMEM),
            scratch_shapes=[pltpu.VMEM((N, N), jnp.float32)],
        ),
        compiler_params=pltpu.CompilerParams(
            dimension_semantics=("arbitrary",),
            vmem_limit_bytes=vmem_limit),
    )(Z)
    return out[0, 0]


def _reference(X, Y, n_kernels=5, mul_factor=2.0, bandwidth=None):
    """Pure-JAX reference mirroring the PyTorch MMD2 module, for validation."""
    Bx, By = X.shape[0], Y.shape[0]
    Xf = jnp.reshape(X, (Bx, -1)).astype(jnp.float32)
    Yf = jnp.reshape(Y, (By, -1)).astype(jnp.float32)
    Z = jnp.concatenate([Xf, Yf], axis=0)
    N = Z.shape[0]
    d2 = jnp.sum((Z[:, None, :] - Z[None, :, :]) ** 2, axis=-1)
    if bandwidth is None:
        bw = jnp.sum(d2) / (N * N - N)
    else:
        bw = jnp.float32(bandwidth)
    mults = mul_factor ** (jnp.arange(n_kernels, dtype=jnp.float32)
                           - n_kernels // 2)
    K = jnp.sum(jnp.exp(-d2[None] / (bw * mults)[:, None, None]), axis=0)
    XX = jnp.mean(K[:Bx, :Bx])
    XY = jnp.mean(K[:Bx, Bx:])
    YY = jnp.mean(K[Bx:, Bx:])
    return XX - 2.0 * XY + YY


if __name__ == "__main__":
    key = jax.random.PRNGKey(0)
    kx, ky = jax.random.split(key)
    # NCHW, matching the PyTorch module's expected input layout.
    X = jax.random.normal(kx, (2, 4, 16, 16), dtype=jnp.float32)
    Y = 0.5 * jax.random.normal(ky, (2, 4, 16, 16), dtype=jnp.float32) + 0.3

    out = jax.block_until_ready(mmd2(X, Y))
    ref = jax.block_until_ready(_reference(X, Y))
    assert jnp.allclose(out, ref, rtol=1e-4, atol=1e-5), (out, ref)

    print("KERNEL_OK")
</pallas_src>

<mosaic_0001>
module attributes {stable_mosaic.version = 11 : i64} {
  func.func @_mmd2_kernel(%arg0: i32, %arg1: memref<4x1024xf32, #tpu.memory_space<vmem>>, %arg2: memref<1x1xf32, #tpu.memory_space<smem>>, %arg3: memref<4x4xf32, #tpu.memory_space<vmem>>) attributes {dimension_semantics = [#tpu.dimension_semantics<arbitrary>], iteration_bounds = array<i64: 1>, scalar_prefetch = 0 : i64, scratch_operands = 1 : i64, tpu.core_type = #tpu.core_type<tc>, window_params = [{transform_indices = @transform_0, window_bounds = array<i64: 4, 1024>}, {transform_indices = @transform_1, window_bounds = array<i64: 1, 1>}]} {
    %c0_i32 = arith.constant 0 : i32
    %0 = arith.cmpi eq, %arg0, %c0_i32 : i32
    %1 = arith.extui %0 : i1 to i32
    %c0_i32_0 = arith.constant 0 : i32
    %2 = arith.cmpi ne, %1, %c0_i32_0 : i32
    scf.if %2 {
      %cst_8 = arith.constant 0.000000e+00 : f32
      %11 = vector.broadcast %cst_8 : f32 to vector<4x4xf32>
      %c0_9 = arith.constant 0 : index
      %c0_10 = arith.constant 0 : index
      %12 = vector.load %arg3[%c0_9, %c0_10] : memref<4x4xf32, #tpu.memory_space<vmem>>, vector<4x4xf32>
      tpu.vector_store %arg3[%c0_9, %c0_10], %11 {strides = array<i32>} : memref<4x4xf32, #tpu.memory_space<vmem>>, vector<4x4xf32>,
    } else {
    }
    %c0 = arith.constant 0 : index
    %c0_1 = arith.constant 0 : index
    %3 = vector.load %arg1[%c0, %c0_1] : memref<4x1024xf32, #tpu.memory_space<vmem>>, vector<4x1024xf32>
    %c0_2 = arith.constant 0 : index
    %c0_3 = arith.constant 0 : index
    %4 = vector.load %arg3[%c0_2, %c0_3] : memref<4x4xf32, #tpu.memory_space<vmem>>, vector<4x4xf32>
    %cst = arith.constant dense<0.000000e+00> : vector<4x4xf32>
    %5 = tpu.matmul %3, %3, %cst {dimension_numbers = #tpu.dot_dimension_numbers<[1], [1], [0], [0], [0, 0, 1, 0], [], []>} : vector<4x1024xf32>, vector<4x1024xf32>, vector<4x4xf32> -> vector<4x4xf32>
    %6 = arith.addf %4, %5 : vector<4x4xf32>
    %c0_4 = arith.constant 0 : index
    %c0_5 = arith.constant 0 : index
    %7 = vector.load %arg3[%c0_4, %c0_5] : memref<4x4xf32, #tpu.memory_space<vmem>>, vector<4x4xf32>
    tpu.vector_store %arg3[%c0_4, %c0_5], %6 {strides = array<i32>} : memref<4x4xf32, #tpu.memory_space<vmem>>, vector<4x4xf32>,
    %c0_i32_6 = arith.constant 0 : i32
    %8 = arith.cmpi eq, %arg0, %c0_i32_6 : i32
    %9 = arith.extui %8 : i1 to i32
    %c0_i32_7 = arith.constant 0 : i32
    %10 = arith.cmpi ne, %9, %c0_i32_7 : i32
    scf.if %10 {
      %c0_8 = arith.constant 0 : index
      %c0_9 = arith.constant 0 : index
      %11 = vector.load %arg3[%c0_8, %c0_9] : memref<4x4xf32, #tpu.memory_space<vmem>>, vector<4x4xf32>
      %12 = tpu.iota {dimensions = array<i32: 0>} : vector<4x4xi32>
      %13 = tpu.iota {dimensions = array<i32: 1>} : vector<4x4xi32>
      %14 = arith.cmpi eq, %12, %13 : vector<4x4xi32>
      %cst_10 = arith.constant 0.000000e+00 : f32
      %15 = vector.broadcast %cst_10 : f32 to vector<4x4xf32>
      %16 = arith.select %14, %11, %15 : vector<4x4xi1>, vector<4x4xf32>
      %cst_11 = arith.constant dense<0.000000e+00> : vector<4xf32>
      %17 = vector.multi_reduction <add>, %16, %cst_11 [1] : vector<4x4xf32> to vector<4xf32>
      %18 = vector.shape_cast %17 : vector<4xf32> to vector<4x1xf32>
      %cst_12 = arith.constant dense<0.000000e+00> : vector<4xf32>
      %19 = vector.multi_reduction <add>, %16, %cst_12 [0] : vector<4x4xf32> to vector<4xf32>
      %20 = vector.shape_cast %19 : vector<4xf32> to vector<1x4xf32>
      %21 = vector.broadcast %18 : vector<4x1xf32> to vector<4x4xf32>
      %22 = vector.broadcast %20 : vector<1x4xf32> to vector<4x4xf32>
      %23 = arith.addf %21, %22 : vector<4x4xf32>
      %cst_13 = arith.constant 2.000000e+00 : f32
      %24 = vector.broadcast %cst_13 : f32 to vector<4x4xf32>
      %25 = arith.mulf %24, %11 : vector<4x4xf32>
      %26 = arith.subf %23, %25 : vector<4x4xf32>
      %cst_14 = arith.constant 0.000000e+00 : f32
      %27 = vector.broadcast %cst_14 : f32 to vector<4x4xf32>
      %28 = arith.maximumf %26, %27 : vector<4x4xf32>
      %29 = vector.shape_cast %28 : vector<4x4xf32> to vector<1x4x4xf32>
      %cst_15 = arith.constant dense<0.000000e+00> : vector<1xf32>
      %30 = vector.multi_reduction <add>, %29, %cst_15 [1, 2] : vector<1x4x4xf32> to vector<1xf32>
      %31 = vector.shape_cast %30 : vector<1xf32> to vector<1x1x1xf32>
      %32 = vector.extract %31[0, 0, 0] : f32 from vector<1x1x1xf32>
      %cst_16 = arith.constant 1.200000e+01 : f32
      %33 = arith.divf %32, %cst_16 : f32
      %cst_17 = arith.constant 1.000000e+00 : f32
      %34 = arith.divf %cst_17, %33 : f32
      %35 = tpu.iota {dimensions = array<i32: 0>} : vector<4x1xi32>
      %36 = tpu.iota {dimensions = array<i32: 1>} : vector<1x4xi32>
      %c2_i32 = arith.constant 2 : i32
      %37 = vector.broadcast %c2_i32 : i32 to vector<4x1xi32>
      %38 = arith.cmpi slt, %35, %37 : vector<4x1xi32>
      %cst_18 = arith.constant 5.000000e-01 : f32
      %cst_19 = arith.constant -5.000000e-01 : f32
      %39 = vector.broadcast %cst_18 : f32 to vector<4x1xf32>
      %40 = vector.broadcast %cst_19 : f32 to vector<4x1xf32>
      %41 = arith.select %38, %39, %40 : vector<4x1xi1>, vector<4x1xf32>
      %c2_i32_20 = arith.constant 2 : i32
      %42 = vector.broadcast %c2_i32_20 : i32 to vector<1x4xi32>
      %43 = arith.cmpi slt, %36, %42 : vector<1x4xi32>
      %cst_21 = arith.constant 5.000000e-01 : f32
      %cst_22 = arith.constant -5.000000e-01 : f32
      %44 = vector.broadcast %cst_21 : f32 to vector<1x4xf32>
      %45 = vector.broadcast %cst_22 : f32 to vector<1x4xf32>
      %46 = arith.select %43, %44, %45 : vector<1x4xi1>, vector<1x4xf32>
      %47 = vector.broadcast %41 : vector<4x1xf32> to vector<4x4xf32>
      %48 = vector.broadcast %46 : vector<1x4xf32> to vector<4x4xf32>
      %49 = arith.mulf %47, %48 : vector<4x4xf32>
      %cst_23 = arith.constant -4.000000e+00 : f32
      %50 = arith.mulf %cst_23, %34 : f32
      %51 = vector.broadcast %50 : f32 to vector<4x4xf32>
      %52 = arith.mulf %28, %51 : vector<4x4xf32>
      %53 = math.exp %52 : vector<4x4xf32>
      %54 = arith.mulf %49, %53 : vector<4x4xf32>
      %55 = vector.shape_cast %54 : vector<4x4xf32> to vector<1x4x4xf32>
      %cst_24 = arith.constant dense<0.000000e+00> : vector<1xf32>
      %56 = vector.multi_reduction <add>, %55, %cst_24 [1, 2] : vector<1x4x4xf32> to vector<1xf32>
      %57 = vector.shape_cast %56 : vector<1xf32> to vector<1x1x1xf32>
      %58 = vector.extract %57[0, 0, 0] : f32 from vector<1x1x1xf32>
      %cst_25 = arith.constant 0.000000e+00 : f32
      %59 = arith.addf %cst_25, %58 : f32
      %cst_26 = arith.constant -2.000000e+00 : f32
      %60 = arith.mulf %cst_26, %34 : f32
      %61 = vector.broadcast %60 : f32 to vector<4x4xf32>
      %62 = arith.mulf %28, %61 : vector<4x4xf32>
      %63 = math.exp %62 : vector<4x4xf32>
      %64 = arith.mulf %49, %63 : vector<4x4xf32>
      %65 = vector.shape_cast %64 : vector<4x4xf32> to vector<1x4x4xf32>
      %cst_27 = arith.constant dense<0.000000e+00> : vector<1xf32>
      %66 = vector.multi_reduction <add>, %65, %cst_27 [1, 2] : vector<1x4x4xf32> to vector<1xf32>
      %67 = vector.shape_cast %66 : vector<1xf32> to vector<1x1x1xf32>
      %68 = vector.extract %67[0, 0, 0] : f32 from vector<1x1x1xf32>
      %69 = arith.addf %59, %68 : f32
      %cst_28 = arith.constant -1.000000e+00 : f32
      %70 = arith.mulf %cst_28, %34 : f32
      %71 = vector.broadcast %70 : f32 to vector<4x4xf32>
      %72 = arith.mulf %28, %71 : vector<4x4xf32>
      %73 = math.exp %72 : vector<4x4xf32>
      %74 = arith.mulf %49, %73 : vector<4x4xf32>
      %75 = vector.shape_cast %74 : vector<4x4xf32> to vector<1x4x4xf32>
      %cst_29 = arith.constant dense<0.000000e+00> : vector<1xf32>
      %76 = vector.multi_reduction <add>, %75, %cst_29 [1, 2] : vector<1x4x4xf32> to vector<1xf32>
      %77 = vector.shape_cast %76 : vector<1xf32> to vector<1x1x1xf32>
      %78 = vector.extract %77[0, 0, 0] : f32 from vector<1x1x1xf32>
      %79 = arith.addf %69, %78 : f32
      %cst_30 = arith.constant -5.000000e-01 : f32
      %80 = arith.mulf %cst_30, %34 : f32
      %81 = vector.broadcast %80 : f32 to vector<4x4xf32>
      %82 = arith.mulf %28, %81 : vector<4x4xf32>
      %83 = math.exp %82 : vector<4x4xf32>
      %84 = arith.mulf %49, %83 : vector<4x4xf32>
      %85 = vector.shape_cast %84 : vector<4x4xf32> to vector<1x4x4xf32>
      %cst_31 = arith.constant dense<0.000000e+00> : vector<1xf32>
      %86 = vector.multi_reduction <add>, %85, %cst_31 [1, 2] : vector<1x4x4xf32> to vector<1xf32>
      %87 = vector.shape_cast %86 : vector<1xf32> to vector<1x1x1xf32>
      %88 = vector.extract %87[0, 0, 0] : f32 from vector<1x1x1xf32>
      %89 = arith.addf %79, %88 : f32
      %cst_32 = arith.constant -2.500000e-01 : f32
      %90 = arith.mulf %cst_32, %34 : f32
      %91 = vector.broadcast %90 : f32 to vector<4x4xf32>
      %92 = arith.mulf %28, %91 : vector<4x4xf32>
      %93 = math.exp %92 : vector<4x4xf32>
      %94 = arith.mulf %49, %93 : vector<4x4xf32>
      %95 = vector.shape_cast %94 : vector<4x4xf32> to vector<1x4x4xf32>
      %cst_33 = arith.constant dense<0.000000e+00> : vector<1xf32>
      %96 = vector.multi_reduction <add>, %95, %cst_33 [1, 2] : vector<1x4x4xf32> to vector<1xf32>
      %97 = vector.shape_cast %96 : vector<1xf32> to vector<1x1x1xf32>
      %98 = vector.extract %97[0, 0, 0] : f32 from vector<1x1x1xf32>
      %99 = arith.addf %89, %98 : f32
      %c0_34 = arith.constant 0 : index
      %c0_35 = arith.constant 0 : index
      %100 = memref.load %arg2[%c0_34, %c0_35] : memref<1x1xf32, #tpu.memory_space<smem>>
      memref.store %99, %arg2[%c0_34, %c0_35] : memref<1x1xf32, #tpu.memory_space<smem>>
    } else {
    }
    return
  }
  func.func @transform_0(%arg0: i32) -> (i32, i32) {
    %c0_i32 = arith.constant 0 : i32
    %c0_i32_0 = arith.constant 0 : i32
    return %c0_i32, %arg0 : i32, i32
  }
  func.func @transform_1(%arg0: i32) -> (i32, i32) {
    %c0_i32 = arith.constant 0 : i32
    %c0_i32_0 = arith.constant 0 : i32
    %c0_i32_1 = arith.constant 0 : i32
    return %c0_i32, %c0_i32_0 : i32, i32
  }
}

</mosaic_0001>

<llo_original>
// kernel: tpu_custom_call.1
$region0: #{tpu_custom_call.1}
  #allocation0 [shape = 'u32[]', space=smem, size = 0x4, offset = 0x4, fixed_abs, tag = 'smem constant byte address 0x4 - core index']
  #allocation1 [shape = 'u32[144,128]{1,0:T(1,128)}', space=vmem, size = 0x12000, scoped, tag = 'internal scratch']
  #allocation2 [shape = 'f32[4,4]{1,0:T(4,128)}', space=vmem, size = 0x800, scoped, tag = 'scratch operand']
  %s0 = inlined_call_operand.hbm [shape: f32[4,1024], index: 0, kind: input, shape index: {}]
  %s1 = inlined_call_operand.hbm [shape: f32[1,1], index: 1, kind: output, shape index: {}]
  %s2 = sld [smem:[#allocation0]]
  $region26: #{tpu_custom_call.1} parent=0
    _
  %s4 = ssub.s32 1, %s2
  %s5 = scalar_select 0, %s4, %s2
  $region1: #{tpu_custom_call.1} parent=0
    #allocation3 [shape = 'u8[16384]{0}', space=vmem, size = 0x4000, scoped, tag = 'input window, operand 0, single buffered']
    #allocation4 [shape = 's32[1]{0}', space=sflag, size = 0x4, scoped, tag = 'scoped memory for tpu_custom_call.1']
    #allocation5 [shape = 's32[1]{0}', space=sflag, size = 0x4, scoped, tag = 'scoped memory for tpu_custom_call.1']
    #allocation6 [shape = 'u8[512]{0}', space=smem, size = 0x200, scoped, tag = 'output window, operand 0, single buffered']
    %6 = vsyncpa [#allocation4], 0
    %7 = vsyncpa [#allocation5], 0
    // Predicated region
    $region2: #{tpu_custom_call.1} parent=1 // pred_check
      _
    $region3: #{tpu_custom_call.1} parent=1 // pred_check_branch
      %9 = sbr.rel (0) target = $region5
    $region4: #{tpu_custom_call.1} parent=1 // pred_region
      %s11 = ssub.s32 512, 512
      %12 = vsyncadd [#allocation4], %s11
      %s14 = sshll.u32 [#allocation3], 4
      %s15 = int_to_ptr.vmem [resolvable:$true] %s14
      %17 = dma.hbm_to_vmem [thread:$0]  %s0, 512, %s15, [#allocation4]
    $region5: #{tpu_custom_call.1} parent=1 // pred_fallthru
      _
    // Predicated region
    $region6: #{tpu_custom_call.1} parent=1 // pred_check
      _
    $region7: #{tpu_custom_call.1} parent=1 // pred_check_branch
      %19 = sbr.rel (0) target = $region9
    $region8: #{tpu_custom_call.1} parent=1 // pred_region
      %20 = dma.done [#allocation4], 512
    $region9: #{tpu_custom_call.1} parent=1 // pred_fallthru
      _
    %p21 = scmp.eq.s32.totalorder 0, 0
    // Predicated region
    $region10: #{tpu_custom_call.1} parent=1 // pred_check
      %p22 = pneg %p21
    $region11: #{tpu_custom_call.1} parent=1 // pred_check_branch
      %24 = sbr.rel (%p22) target = $region13
    $region12: #{tpu_custom_call.1} parent=1 // pred_region
      %vm25 = vcmask 27648
      %26 = vst.msk [vmem:[#allocation2] sm:$0xf] %vm25, 0.0
    $region13: #{tpu_custom_call.1} parent=1 // pred_fallthru
      _
    %v27 = vld [vmem:[#allocation3] sm:$0xff]
    %v28 = vld [vmem:[#allocation3 + $0x8] sm:$0xff]
    %v29 = vld [vmem:[#allocation3 + $0x10] sm:$0xff]
    %v30 = vld [vmem:[#allocation3 + $0x18] sm:$0xff]
    %v31 = vld [vmem:[#allocation2] sm:$0xf]
    %v36 = vcombine.high %v27, %v27
    %v37 = vcombine.high %v28, %v28
    %v38 = vcombine.high %v29, %v29
    %v39 = vcombine.high %v30, %v30
    %44 = vmatprep.subr.mxu0 %v36
    %45 = vmatpush1.xpose.msra.mxu0 %v27
    %46 = vmatprep.subr.mxu0 0.0
    %47 = vmatpush1.xpose.msra.mxu0 0.0
    %48 = vmatprep.subr.mxu0 0.0
    %49 = vmatpush1.xpose.msra.mxu0 0.0
    %50 = vmatprep.subr.mxu0 0.0
    %51 = vmatpush1.xpose.msra.mxu0 0.0
    %52 = vmatprep.subr.mxu0 0.0
    %53 = vmatpush1.xpose.msra.mxu0 0.0
    %54 = vmatprep.subr.mxu0 0.0
    %55 = vmatpush1.xpose.msra.mxu0 0.0
    %56 = vmatprep.subr.mxu0 0.0
    %57 = vmatpush1.xpose.msra.mxu0 0.0
    %58 = vmatprep.subr.mxu0 0.0
    %59 = vmatpush1.xpose.msra.mxu0 0.0
    %60 = vmatprep.subr.mxu0 0.0
    %61 = vmatpush1.xpose.msra.mxu0 0.0
    %62 = vmatprep.subr.mxu0 0.0
    %63 = vmatpush1.xpose.msra.mxu0 0.0
    %64 = vmatprep.subr.mxu0 0.0
    %65 = vmatpush1.xpose.msra.mxu0 0.0
    %66 = vmatprep.subr.mxu0 0.0
    %67 = vmatpush1.xpose.msra.mxu0 0.0
    %68 = vmatprep.subr.mxu0 0.0
    %69 = vmatpush1.xpose.msra.mxu0 0.0
    %70 = vmatprep.subr.mxu0 0.0
    %71 = vmatpush1.xpose.msra.mxu0 0.0
    %72 = vmatprep.subr.mxu0 0.0
    %73 = vmatpush1.xpose.msra.mxu0 0.0
    %74 = vmatprep.subr.mxu0 0.0
    %75 = vmatpush1.xpose.msra.mxu0 0.0
    %76 = vmatprep.subr.mxu0 0.0
    %77 = vmatpush1.xpose.msra.mxu0 0.0
    %78 = vmatprep.subr.mxu0 0.0
    %79 = vmatpush1.xpose.msra.mxu0 0.0
    %80 = vmatprep.subr.mxu0 0.0
    %81 = vmatpush1.xpose.msra.mxu0 0.0
    %82 = vmatprep.subr.mxu0 0.0
    %83 = vmatpush1.xpose.msra.mxu0 0.0
    %84 = vmatprep.subr.mxu0 0.0
    %85 = vmatpush1.xpose.msra.mxu0 0.0
    %86 = vmatprep.subr.mxu0 0.0
    %87 = vmatpush1.xpose.msra.mxu0 0.0
    %88 = vmatprep.subr.mxu0 0.0
    %89 = vmatpush1.xpose.msra.mxu0 0.0
    %90 = vmatprep.subr.mxu0 0.0
    %91 = vmatpush1.xpose.msra.mxu0 0.0
    %92 = vmatprep.subr.mxu0 0.0
    %93 = vmatpush1.xpose.msra.mxu0 0.0
    %94 = vmatprep.subr.mxu0 0.0
    %95 = vmatpush1.xpose.msra.mxu0 0.0
    %96 = vmatprep.subr.mxu0 0.0
    %97 = vmatpush1.xpose.msra.mxu0 0.0
    %98 = vmatprep.subr.mxu0 0.0
    %99 = vmatpush1.xpose.msra.mxu0 0.0
    %100 = vmatprep.subr.mxu0 0.0
    %101 = vmatpush1.xpose.msra.mxu0 0.0
    %102 = vmatprep.subr.mxu0 0.0
    %103 = vmatpush1.xpose.msra.mxu0 0.0
    %104 = vmatprep.subr.mxu0 0.0
    %105 = vmatpush1.xpose.msra.mxu0 0.0
    %106 = vmatprep.subr.mxu0 0.0
    %107 = vmatpush1.xpose.msra.mxu0 0.0
    %108 = vmatprep.mubr.f32.mxu0 %v36
    %109 = vmatmul.mubr.f32.gmra.mrb[0].mxu0 %v27
    %v110 = vpop.f32.mrb[0].mxu0
    %v111 = vadd.f32 0.0, %v110
    %v112 = vpop.f32.mrb[0].mxu0
    %113 = vdwg.mxu0
    %114 = vmatprep.subr.mxu0 %v37
    %115 = vmatpush1.xpose.msra.mxu0 %v28
    %116 = vmatprep.subr.mxu0 0.0
    %117 = vmatpush1.xpose.msra.mxu0 0.0
    %118 = vmatprep.subr.mxu0 0.0
    %119 = vmatpush1.xpose.msra.mxu0 0.0
    %120 = vmatprep.subr.mxu0 0.0
    %121 = vmatpush1.xpose.msra.mxu0 0.0
    %122 = vmatprep.subr.mxu0 0.0
    %123 = vmatpush1.xpose.msra.mxu0 0.0
    %124 = vmatprep.subr.mxu0 0.0
    %125 = vmatpush1.xpose.msra.mxu0 0.0
    %126 = vmatprep.subr.mxu0 0.0
    %127 = vmatpush1.xpose.msra.mxu0 0.0
    %128 = vmatprep.subr.mxu0 0.0
    %129 = vmatpush1.xpose.msra.mxu0 0.0
    %130 = vmatprep.subr.mxu0 0.0
    %131 = vmatpush1.xpose.msra.mxu0 0.0
    %132 = vmatprep.subr.mxu0 0.0
    %133 = vmatpush1.xpose.msra.mxu0 0.0
    %134 = vmatprep.subr.mxu0 0.0
    %135 = vmatpush1.xpose.msra.mxu0 0.0
    %136 = vmatprep.subr.mxu0 0.0
    %137 = vmatpush1.xpose.msra.mxu0 0.0
    %138 = vmatprep.subr.mxu0 0.0
    %139 = vmatpush1.xpose.msra.mxu0 0.0
    %140 = vmatprep.subr.mxu0 0.0
    %141 = vmatpush1.xpose.msra.mxu0 0.0
    %142 = vmatprep.subr.mxu0 0.0
    %143 = vmatpush1.xpose.msra.mxu0 0.0
    %144 = vmatprep.subr.mxu0 0.0
    %145 = vmatpush1.xpose.msra.mxu0 0.0
    %146 = vmatprep.subr.mxu0 0.0
    %147 = vmatpush1.xpose.msra.mxu0 0.0
    %148 = vmatprep.subr.mxu0 0.0
    %149 = vmatpush1.xpose.msra.mxu0 0.0
    %150 = vmatprep.subr.mxu0 0.0
    %151 = vmatpush1.xpose.msra.mxu0 0.0
    %152 = vmatprep.subr.mxu0 0.0
    %153 = vmatpush1.xpose.msra.mxu0 0.0
    %154 = vmatprep.subr.mxu0 0.0
    %155 = vmatpush1.xpose.msra.mxu0 0.0
    %156 = vmatprep.subr.mxu0 0.0
    %157 = vmatpush1.xpose.msra.mxu0 0.0
    %158 = vmatprep.subr.mxu0 0.0
    %159 = vmatpush1.xpose.msra.mxu0 0.0
    %160 = vmatprep.subr.mxu0 0.0
    %161 = vmatpush1.xpose.msra.mxu0 0.0
    %162 = vmatprep.subr.mxu0 0.0
    %163 = vmatpush1.xpose.msra.mxu0 0.0
    %164 = vmatprep.subr.mxu0 0.0
    %165 = vmatpush1.xpose.msra.mxu0 0.0
    %166 = vmatprep.subr.mxu0 0.0
    %167 = vmatpush1.xpose.msra.mxu0 0.0
    %168 = vmatprep.subr.mxu0 0.0
    %169 = vmatpush1.xpose.msra.mxu0 0.0
    %170 = vmatprep.subr.mxu0 0.0
    %171 = vmatpush1.xpose.msra.mxu0 0.0
    %172 = vmatprep.subr.mxu0 0.0
    %173 = vmatpush1.xpose.msra.mxu0 0.0
    %174 = vmatprep.subr.mxu0 0.0
    %175 = vmatpush1.xpose.msra.mxu0 0.0
    %176 = vmatprep.subr.mxu0 0.0
    %177 = vmatpush1.xpose.msra.mxu0 0.0
    %178 = vmatprep.mubr.f32.mxu0 %v37
    %179 = vmatmul.mubr.f32.gmra.mrb[0].mxu0 %v28
    %v180 = vpop.f32.mrb[0].mxu0
    %v181 = vadd.f32 %v111, %v180
    %v182 = vpop.f32.mrb[0].mxu0
    %183 = vdwg.mxu0
    %184 = vmatprep.subr.mxu0 %v38
    %185 = vmatpush1.xpose.msra.mxu0 %v29
    %186 = vmatprep.subr.mxu0 0.0
    %187 = vmatpush1.xpose.msra.mxu0 0.0
    %188 = vmatprep.subr.mxu0 0.0
    %189 = vmatpush1.xpose.msra.mxu0 0.0
    %190 = vmatprep.subr.mxu0 0.0
    %191 = vmatpush1.xpose.msra.mxu0 0.0
    %192 = vmatprep.subr.mxu0 0.0
    %193 = vmatpush1.xpose.msra.mxu0 0.0
    %194 = vmatprep.subr.mxu0 0.0
    %195 = vmatpush1.xpose.msra.mxu0 0.0
    %196 = vmatprep.subr.mxu0 0.0
    %197 = vmatpush1.xpose.msra.mxu0 0.0
    %198 = vmatprep.subr.mxu0 0.0
    %199 = vmatpush1.xpose.msra.mxu0 0.0
    %200 = vmatprep.subr.mxu0 0.0
    %201 = vmatpush1.xpose.msra.mxu0 0.0
    %202 = vmatprep.subr.mxu0 0.0
    %203 = vmatpush1.xpose.msra.mxu0 0.0
    %204 = vmatprep.subr.mxu0 0.0
    %205 = vmatpush1.xpose.msra.mxu0 0.0
    %206 = vmatprep.subr.mxu0 0.0
    %207 = vmatpush1.xpose.msra.mxu0 0.0
    %208 = vmatprep.subr.mxu0 0.0
    %209 = vmatpush1.xpose.msra.mxu0 0.0
    %210 = vmatprep.subr.mxu0 0.0
    %211 = vmatpush1.xpose.msra.mxu0 0.0
    %212 = vmatprep.subr.mxu0 0.0
    %213 = vmatpush1.xpose.msra.mxu0 0.0
    %214 = vmatprep.subr.mxu0 0.0
    %215 = vmatpush1.xpose.msra.mxu0 0.0
    %216 = vmatprep.subr.mxu0 0.0
    %217 = vmatpush1.xpose.msra.mxu0 0.0
    %218 = vmatprep.subr.mxu0 0.0
    %219 = vmatpush1.xpose.msra.mxu0 0.0
    %220 = vmatprep.subr.mxu0 0.0
    %221 = vmatpush1.xpose.msra.mxu0 0.0
    %222 = vmatprep.subr.mxu0 0.0
    %223 = vmatpush1.xpose.msra.mxu0 0.0
    %224 = vmatprep.subr.mxu0 0.0
    %225 = vmatpush1.xpose.msra.mxu0 0.0
    %226 = vmatprep.subr.mxu0 0.0
    %227 = vmatpush1.xpose.msra.mxu0 0.0
    %228 = vmatprep.subr.mxu0 0.0
    %229 = vmatpush1.xpose.msra.mxu0 0.0
    %230 = vmatprep.subr.mxu0 0.0
    %231 = vmatpush1.xpose.msra.mxu0 0.0
    %232 = vmatprep.subr.mxu0 0.0
    %233 = vmatpush1.xpose.msra.mxu0 0.0
    %234 = vmatprep.subr.mxu0 0.0
    %235 = vmatpush1.xpose.msra.mxu0 0.0
    %236 = vmatprep.subr.mxu0 0.0
    %237 = vmatpush1.xpose.msra.mxu0 0.0
    %238 = vmatprep.subr.mxu0 0.0
    %239 = vmatpush1.xpose.msra.mxu0 0.0
    %240 = vmatprep.subr.mxu0 0.0
    %241 = vmatpush1.xpose.msra.mxu0 0.0
    %242 = vmatprep.subr.mxu0 0.0
    %243 = vmatpush1.xpose.msra.mxu0 0.0
    %244 = vmatprep.subr.mxu0 0.0
    %245 = vmatpush1.xpose.msra.mxu0 0.0
    %246 = vmatprep.subr.mxu0 0.0
    %247 = vmatpush1.xpose.msra.mxu0 0.0
    %248 = vmatprep.mubr.f32.mxu0 %v38
    %249 = vmatmul.mubr.f32.gmra.mrb[0].mxu0 %v29
    %v250 = vpop.f32.mrb[0].mxu0
    %v251 = vadd.f32 %v181, %v250
    %v252 = vpop.f32.mrb[0].mxu0
    %253 = vdwg.mxu0
    %254 = vmatprep.subr.mxu0 %v39
    %255 = vmatpush1.xpose.msra.mxu0 %v30
    %256 = vmatprep.subr.mxu0 0.0
    %257 = vmatpush1.xpose.msra.mxu0 0.0
    %258 = vmatprep.subr.mxu0 0.0
    %259 = vmatpush1.xpose.msra.mxu0 0.0
    %260 = vmatprep.subr.mxu0 0.0
    %261 = vmatpush1.xpose.msra.mxu0 0.0
    %262 = vmatprep.subr.mxu0 0.0
    %263 = vmatpush1.xpose.msra.mxu0 0.0
    %264 = vmatprep.subr.mxu0 0.0
    %265 = vmatpush1.xpose.msra.mxu0 0.0
    %266 = vmatprep.subr.mxu0 0.0
    %267 = vmatpush1.xpose.msra.mxu0 0.0
    %268 = vmatprep.subr.mxu0 0.0
    %269 = vmatpush1.xpose.msra.mxu0 0.0
    %270 = vmatprep.subr.mxu0 0.0
    %271 = vmatpush1.xpose.msra.mxu0 0.0
    %272 = vmatprep.subr.mxu0 0.0
    %273 = vmatpush1.xpose.msra.mxu0 0.0
    %274 = vmatprep.subr.mxu0 0.0
    %275 = vmatpush1.xpose.msra.mxu0 0.0
    %276 = vmatprep.subr.mxu0 0.0
    %277 = vmatpush1.xpose.msra.mxu0 0.0
    %278 = vmatprep.subr.mxu0 0.0
    %279 = vmatpush1.xpose.msra.mxu0 0.0
    %280 = vmatprep.subr.mxu0 0.0
    %281 = vmatpush1.xpose.msra.mxu0 0.0
    %282 = vmatprep.subr.mxu0 0.0
    %283 = vmatpush1.xpose.msra.mxu0 0.0
    %284 = vmatprep.subr.mxu0 0.0
    %285 = vmatpush1.xpose.msra.mxu0 0.0
    %286 = vmatprep.subr.mxu0 0.0
    %287 = vmatpush1.xpose.msra.mxu0 0.0
    %288 = vmatprep.subr.mxu0 0.0
    %289 = vmatpush1.xpose.msra.mxu0 0.0
    %290 = vmatprep.subr.mxu0 0.0
    %291 = vmatpush1.xpose.msra.mxu0 0.0
    %292 = vmatprep.subr.mxu0 0.0
    %293 = vmatpush1.xpose.msra.mxu0 0.0
    %294 = vmatprep.subr.mxu0 0.0
    %295 = vmatpush1.xpose.msra.mxu0 0.0
    %296 = vmatprep.subr.mxu0 0.0
    %297 = vmatpush1.xpose.msra.mxu0 0.0
    %298 = vmatprep.subr.mxu0 0.0
    %299 = vmatpush1.xpose.msra.mxu0 0.0
    %300 = vmatprep.subr.mxu0 0.0
    %301 = vmatpush1.xpose.msra.mxu0 0.0
    %302 = vmatprep.subr.mxu0 0.0
    %303 = vmatpush1.xpose.msra.mxu0 0.0
    %304 = vmatprep.subr.mxu0 0.0
    %305 = vmatpush1.xpose.msra.mxu0 0.0
    %306 = vmatprep.subr.mxu0 0.0
    %307 = vmatpush1.xpose.msra.mxu0 0.0
    %308 = vmatprep.subr.mxu0 0.0
    %309 = vmatpush1.xpose.msra.mxu0 0.0
    %310 = vmatprep.subr.mxu0 0.0
    %311 = vmatpush1.xpose.msra.mxu0 0.0
    %312 = vmatprep.subr.mxu0 0.0
    %313 = vmatpush1.xpose.msra.mxu0 0.0
    %314 = vmatprep.subr.mxu0 0.0
    %315 = vmatpush1.xpose.msra.mxu0 0.0
    %316 = vmatprep.subr.mxu0 0.0
    %317 = vmatpush1.xpose.msra.mxu0 0.0
    %318 = vmatprep.mubr.f32.mxu0 %v39
    %319 = vmatmul.mubr.f32.gmra.mrb[0].mxu0 %v30
    %v320 = vpop.f32.mrb[0].mxu0
    %v321 = vadd.f32 %v251, %v320
    %v322 = vpop.f32.mrb[0].mxu0
    %323 = vdwg.mxu0
    %v324 = vadd.f32 %v31, %v321
    %vm325 = vcmask 27648
    %326 = vst.msk [vmem:[#allocation2] sm:$0xf] %vm325, %v324
    // Predicated region
    $region14: #{tpu_custom_call.1} parent=1 // pred_check
      %p327 = pneg %p21
    $region15: #{tpu_custom_call.1} parent=1 // pred_check_branch
      %329 = sbr.rel (%p327) target = $region17
    $region16: #{tpu_custom_call.1} parent=1 // pred_region
      %v330 = vld [vmem:[#allocation2] sm:$0xf]
      %v331 = vlaneseq
      %v332 = vshrl.u32 %v331, 7
      %v333 = vlaneseq
      %v334 = vand.u32 %v333, 127
      %vm335 = vcmp.eq.s32.totalorder %v332, %v334
      %v336 = vsel %vm335, %v330, 0.0
      %v337 = vsel %vm325, %v336, 0.0
      %338 = vadd.xlane.f32.xlu0 %v337
      %v339 = vpop.xlane.xlu0 %338
      %v340 = vrot.slane %v337, 4
      %v341 = vadd.f32 %v337, %v340
      %v342 = vrot.slane %v341, 2
      %v343 = vadd.f32 %v341, %v342
      %v344 = vrot.slane %v343, 1
      %v345 = vadd.f32 %v343, %v344
      %v346 = vadd.f32 %v339, %v345
      %v347 = vmul.f32 %v330, 2.0
      %v348 = vsub.f32 %v346, %v347
      %v349 = vmax.f32 %v348, 0.0
      %v350 = vsel %vm325, %v349, 0.0
      %351 = vadd.xlane.f32.xlu0 %v350
      %v352 = vpop.xlane.xlu0 %351
      %v353 = vrot.slane %v352, 4
      %v354 = vadd.f32 %v352, %v353
      %v355 = vrot.slane %v354, 2
      %v356 = vadd.f32 %v354, %v355
      %v357 = vrot.slane %v356, 1
      %v358 = vadd.f32 %v356, %v357
      %s359 = vtos %v358
      %v360 = vrcp.pop 12.0
      %s361 = vtos %v360
      %s362 = smul.f32 %s359, %s361
      %v363 = vstv %s362
      %v364 = vrcp.pop %v363
      %s365 = vtos %v364
      %vm366 = vcmp.lt.s32.totalorder %v332, 2
      %v367 = vsel %vm366, 0.5, -0.5
      %vm368 = vcmp.lt.s32.totalorder %v334, 2
      %v369 = vsel %vm368, 0.5, -0.5
      %v370 = vmul.f32 %v367, %v369
      %s371 = smul.f32 %s365, -4.0
      %v372 = vstv %s371
      %v373 = vmul.f32 %v349, %v372
      %v374 = vmul.f32 %v373, 1.442695
      %v375 = vpow.pop %v374
      %v376 = vmul.f32 %v370, %v375
      %v377 = vsel %vm325, %v376, 0.0
      %378 = vadd.xlane.f32.xlu0 %v377
      %v379 = vpop.xlane.xlu0 %378
      %v380 = vrot.slane %v379, 4
      %v381 = vadd.f32 %v379, %v380
      %v382 = vrot.slane %v381, 2
      %v383 = vadd.f32 %v381, %v382
      %v384 = vrot.slane %v383, 1
      %v385 = vadd.f32 %v383, %v384
      %s386 = vtos %v385
      %s387 = sadd.f32 %s386, 0.0
      %s388 = smul.f32 %s365, -2.0
      %v389 = vstv %s388
      %v390 = vmul.f32 %v349, %v389
      %v391 = vmul.f32 %v390, 1.442695
      %v392 = vpow.pop %v391
      %v393 = vmul.f32 %v370, %v392
      %v394 = vsel %vm325, %v393, 0.0
      %395 = vadd.xlane.f32.xlu0 %v394
      %v396 = vpop.xlane.xlu0 %395
      %v397 = vrot.slane %v396, 4
      %v398 = vadd.f32 %v396, %v397
      %v399 = vrot.slane %v398, 2
      %v400 = vadd.f32 %v398, %v399
      %v401 = vrot.slane %v400, 1
      %v402 = vadd.f32 %v400, %v401
      %s403 = vtos %v402
      %s404 = sadd.f32 %s387, %s403
      %s405 = smul.f32 %s365, -1.0
      %v406 = vstv %s405
      %v407 = vmul.f32 %v349, %v406
      %v408 = vmul.f32 %v407, 1.442695
      %v409 = vpow.pop %v408
      %v410 = vmul.f32 %v370, %v409
      %v411 = vsel %vm325, %v410, 0.0
      %412 = vadd.xlane.f32.xlu0 %v411
      %v413 = vpop.xlane.xlu0 %412
      %v414 = vrot.slane %v413, 4
      %v415 = vadd.f32 %v413, %v414
      %v416 = vrot.slane %v415, 2
      %v417 = vadd.f32 %v415, %v416
      %v418 = vrot.slane %v417, 1
      %v419 = vadd.f32 %v417, %v418
      %s420 = vtos %v419
      %s421 = sadd.f32 %s404, %s420
      %s422 = smul.f32 %s365, -0.5
      %v423 = vstv %s422
      %v424 = vmul.f32 %v349, %v423
      %v425 = vmul.f32 %v424, 1.442695
      %v426 = vpow.pop %v425
      %v427 = vmul.f32 %v370, %v426
      %v428 = vsel %vm325, %v427, 0.0
      %429 = vadd.xlane.f32.xlu0 %v428
      %v430 = vpop.xlane.xlu0 %429
      %v431 = vrot.slane %v430, 4
      %v432 = vadd.f32 %v430, %v431
      %v433 = vrot.slane %v432, 2
      %v434 = vadd.f32 %v432, %v433
      %v435 = vrot.slane %v434, 1
      %v436 = vadd.f32 %v434, %v435
      %s437 = vtos %v436
      %s438 = sadd.f32 %s421, %s437
      %s439 = smul.f32 %s365, -0.25
      %v440 = vstv %s439
      %v441 = vmul.f32 %v349, %v440
      %v442 = vmul.f32 %v441, 1.442695
      %v443 = vpow.pop %v442
      %v444 = vmul.f32 %v370, %v443
      %v445 = vsel %vm325, %v444, 0.0
      %446 = vadd.xlane.f32.xlu0 %v445
      %v447 = vpop.xlane.xlu0 %446
      %v448 = vrot.slane %v447, 4
      %v449 = vadd.f32 %v447, %v448
      %v450 = vrot.slane %v449, 2
      %v451 = vadd.f32 %v449, %v450
      %v452 = vrot.slane %v451, 1
      %v453 = vadd.f32 %v451, %v452
      %s454 = vtos %v453
      %s455 = sadd.f32 %s438, %s454
      %s456 = scalar_lea.smem [#allocation6], 0
      %457 = sst [smem:[%s456]] %s455
    $region17: #{tpu_custom_call.1} parent=1 // pred_fallthru
      _
    // Predicated region
    $region18: #{tpu_custom_call.1} parent=1 // pred_check
      _
    $region19: #{tpu_custom_call.1} parent=1 // pred_check_branch
      %459 = sbr.rel (0) target = $region21
    $region20: #{tpu_custom_call.1} parent=1 // pred_region
      %s461 = ssub.s32 16, 16
      %462 = vsyncadd [#allocation5], %s461
      %465 = dma.smem_to_hbm [#allocation6], 16, %s1, [#allocation5]
    $region21: #{tpu_custom_call.1} parent=1 // pred_fallthru
      _
    // Predicated region
    $region22: #{tpu_custom_call.1} parent=1 // pred_check
      _
    $region23: #{tpu_custom_call.1} parent=1 // pred_check_branch
      %467 = sbr.rel (0) target = $region25
    $region24: #{tpu_custom_call.1} parent=1 // pred_region
      %468 = dma.done [#allocation5], 16
    $region25: #{tpu_custom_call.1} parent=1 // pred_fallthru
      _
    %469 = sfence
    %470 = vsyncpa [#allocation4], 1
    %471 = vsyncpa [#allocation5], 1

</llo_original>
